<compile_context>
chip_gen: v6e
topology: v6e:2x2x1
jax: 0.10.0
libtpu: 0.0.40
codegen_flags: <defaults>
</compile_context>

<pallas_src>
import functools

import jax
import jax.numpy as jnp
from jax import lax
from jax.experimental import pallas as pl
from jax.experimental.pallas import tpu as pltpu

EPS = 1e-10       # `eps` from the reference file (center-inside-gt test)
IOU_EPS = 1e-6    # mmdet bbox_overlaps eps
LOG_TINY = 1e-12  # clamp for log(iou); iou == 0 -> score ~ a*log(1e-12) (ranks last)


# --------------------------------------------------------------------------- #
# Kernel 1: log-score = (1-a)*log_sigmoid(cls[:,label]) + a*log(iou)           #
#           one (G, TILE_N) block per grid step, anchors on the 128-lane axis. #
# --------------------------------------------------------------------------- #
def _cost_kernel(alpha, onehot_ref, gt_ref, preds_ref, cls_ref, cost_ref):
    # preds_ref: (4, T) predicted boxes, anchors on lanes.
    px1 = preds_ref[0:1, :]; py1 = preds_ref[1:2, :]
    px2 = preds_ref[2:3, :]; py2 = preds_ref[3:4, :]
    # gt_ref: (G, 4), GTs on sublanes.
    gx1 = gt_ref[:, 0:1]; gy1 = gt_ref[:, 1:2]
    gx2 = gt_ref[:, 2:3]; gy2 = gt_ref[:, 3:4]

    # --- IoU (BboxOverlaps2D, mode='iou'), (G, T) ---
    lt_x = jnp.maximum(px1, gx1); lt_y = jnp.maximum(py1, gy1)
    rb_x = jnp.minimum(px2, gx2); rb_y = jnp.minimum(py2, gy2)
    overlap = jnp.maximum(rb_x - lt_x, 0.0) * jnp.maximum(rb_y - lt_y, 0.0)
    area_p = (px2 - px1) * (py2 - py1)                    # (1, T)
    area_g = (gx2 - gx1) * (gy2 - gy1)                    # (G, 1)
    union = jnp.maximum(area_p + area_g - overlap, IOU_EPS)
    ious = overlap * pl.reciprocal(union, approx=True)    # EUP, no f32 divide

    # --- per-GT class logits via gather-as-matmul on the MXU ---
    # logits[g, n] = cls[n, gt_labels[g]]  (onehot: (G, C), cls block: (T, C)).
    # Both operands contract their last dim: the standard attention-style q.k^T
    # pattern the MXU handles natively; f32 accumulation via preferred_element_type.
    logits = lax.dot_general(onehot_ref[...], cls_ref[...],
                             dimension_numbers=(((1,), (1,)), ((), ())),
                             preferred_element_type=jnp.float32)

    # --- log-domain score; the final exp is dropped (monotone, only top_k uses it) ---
    log_sig = -(jnp.maximum(-logits, 0.0) +
                jnp.log(1.0 + jnp.exp(-jnp.abs(logits))))   # stable log-sigmoid
    log_iou = jnp.log(jnp.maximum(ious, LOG_TINY))
    cost_ref[...] = ((1.0 - alpha) * log_sig
                     + alpha * log_iou).astype(cost_ref.dtype)


# --------------------------------------------------------------------------- #
# Kernel 2: scatter candidate weights + in-kernel validity + max over GTs,     #
#           one (1, TILE3) lane-dense output block per grid step.              #
# --------------------------------------------------------------------------- #
def _weight_kernel(topk, low_bound, gt_ref, anch_ref, idxs_ref, cw_ref, w_ref):
    tile_n = anch_ref.shape[1]
    num_gt = gt_ref.shape[0]
    base = pl.program_id(0) * tile_n

    # anchor-box (bboxes) centers, (1, T)
    cx = (anch_ref[0:1, :] + anch_ref[2:3, :]) * 0.5
    cy = (anch_ref[1:2, :] + anch_ref[3:4, :]) * 0.5
    # gt boxes, (G, 1)
    gx1 = gt_ref[:, 0:1]; gy1 = gt_ref[:, 1:2]
    gx2 = gt_ref[:, 2:3]; gy2 = gt_ref[:, 3:4]
    # recomputed in-kernel -> no (N, G) `valid` round trip through HBM
    valid = ((cx - gx1 > EPS) & (cy - gy1 > EPS) &
             (gx2 - cx > EPS) & (gy2 - cy > EPS))           # (G, T) bool

    col = base + lax.broadcasted_iota(jnp.int32, (num_gt, tile_n), 1)  # global anchor id
    wfull = jnp.zeros((num_gt, tile_n), jnp.float32)
    for k in range(topk):                                   # small static unroll
        hit = col == idxs_ref[:, k:k + 1]
        wfull = jnp.maximum(wfull, jnp.where(hit, cw_ref[:, k:k + 1], 0.0))
    wfull = jnp.where(valid, wfull, 0.0)                    # validity applied once
    w = jnp.max(wfull, axis=0, keepdims=True)               # (1, T) sublane reduce
    w = jnp.where(w < low_bound, 0.0, w)
    w_ref[...] = w.astype(w_ref.dtype)


def _pick_tile(n, want):
    """Lane-tile: multiple of 128, <= ~half of N (>=2 tiles for megacore) when possible."""
    want = max(128, (int(want) // 128) * 128)
    if n <= 128:
        return 128
    half = max(128, pl.cdiv(n, 2 * 128) * 128)
    return min(want, half)


# --------------------------------------------------------------------------- #
# Wrapper: PGWAnchorModule.assign (ignore_iof_thr <= 0 path).                  #
# --------------------------------------------------------------------------- #
def pgw_anchor_assign(bboxes, cls_scores, bbox_preds, gt_bboxes, gt_labels,
                      noise_x, noise_y, bbox_levels=None, *,
                      alpha, topk, low_bound=0.0, tile_n=1024, tile_n3=8192):
    """JAX/Pallas equivalent of PGWAnchorModule.assign."""
    del bbox_levels  # unused by the reference forward pass
    # TODO(synk): ignore_iof_thr > 0 / gt_bboxes_ignore branch not implemented.
    bboxes4 = bboxes[:, :4].astype(jnp.float32)
    preds4 = bbox_preds[:, :4].astype(jnp.float32)
    gt4 = gt_bboxes[:, :4].astype(jnp.float32)
    N = bboxes4.shape[0]
    G = gt4.shape[0]
    C = cls_scores.shape[1]
    if N == 0 or G == 0:
        return jnp.zeros((N,), jnp.float32)

    # cls stays in its native dtype (bf16 goes straight into the MXU); the exactly
    # representable one-hot gather matrix matches it so the matmul is single-pass.
    cls_in = cls_scores
    if not jnp.issubdtype(cls_in.dtype, jnp.floating):
        cls_in = cls_in.astype(jnp.float32)
    onehot = jax.nn.one_hot(gt_labels.astype(jnp.int32), C, dtype=cls_in.dtype)  # (G, C)

    preds_t = preds4.T                                        # (4, N), anchors on lanes
    anch_t = bboxes4.T                                        # (4, N)

    cparams = pltpu.CompilerParams(dimension_semantics=("parallel",),
                                   vmem_limit_bytes=48 * 1024 * 1024)

    # ---- stage 1: log-domain cost (G, N), anchors-on-lanes, ragged last tile ----
    # Dominant per-tile VMEM is the cls block (2 * tile1 * C * elt_size); at the
    # default tile1=1024 this is well inside VMEM on v5e/v6e/v7x up to C ~ few 1000.
    tile1 = _pick_tile(N, tile_n)
    grid1 = (pl.cdiv(N, tile1),)
    cost = pl.pallas_call(
        functools.partial(_cost_kernel, float(alpha)),
        grid=grid1,
        in_specs=[
            pl.BlockSpec((G, C), lambda i: (0, 0)),
            pl.BlockSpec((G, 4), lambda i: (0, 0)),
            pl.BlockSpec((4, tile1), lambda i: (0, i)),
            pl.BlockSpec((tile1, C), lambda i: (i, 0)),
        ],
        out_specs=pl.BlockSpec((G, tile1), lambda i: (0, i)),
        out_shape=jax.ShapeDtypeStruct((G, N), jnp.float32),
        compiler_params=cparams,
    )(onehot, gt4, preds_t, cls_in)

    # ---- glue: per-GT top-k anchors (torch.topk(dim=0)) and their pred centers ----
    _, idxs = lax.top_k(cost, topk)                           # (G, K), indices < N
    idxs = idxs.astype(jnp.int32)
    cx = (preds4[:, 0] + preds4[:, 2]) * 0.5                  # (N,)
    cy = (preds4[:, 1] + preds4[:, 3]) * 0.5
    pos_x = cx[idxs]                                          # (G, K)
    pos_y = cy[idxs]

    # ---- stage 2 (plain jnp, tiny): (G, K) 2-D Gaussian MLE -> candidate weights ----
    if topk == 1:
        cand_w = jnp.ones((G, 1), jnp.float32)                # reference: unit weights
    else:
        data_x = pos_x + (noise_x - 0.5) * 0.1
        data_y = pos_y + (noise_y - 0.5) * 0.1
        miu_x = jnp.mean(data_x, axis=1, keepdims=True)       # (G, 1)
        miu_y = jnp.mean(data_y, axis=1, keepdims=True)
        dx = data_x - miu_x
        dy = data_y - miu_y
        s00 = jnp.mean(dx * dx, axis=1, keepdims=True)
        s01 = jnp.mean(dx * dy, axis=1, keepdims=True)
        s11 = jnp.mean(dy * dy, axis=1, keepdims=True)
        det = s00 * s11 - s01 * s01
        inv_den = 1.0 / (det + 1e-10)                         # exact, as in reference
        i00 = s11 * inv_den
        i01 = -s01 * inv_den
        i11 = s00 * inv_den
        px = pos_x - miu_x
        py = pos_y - miu_y
        maha = px * (i00 * px + i01 * py) + py * (i01 * px + i11 * py)
        cand_w = jnp.exp(-0.5 * maha).astype(jnp.float32)     # (G, K)

    # ---- stage 3: scatter + validity + max over GTs; large lane tile, tiny VMEM ----
    tile3 = _pick_tile(N, tile_n3)
    grid3 = (pl.cdiv(N, tile3),)
    w2d = pl.pallas_call(
        functools.partial(_weight_kernel, int(topk), float(low_bound)),
        grid=grid3,
        in_specs=[
            pl.BlockSpec((G, 4), lambda i: (0, 0)),
            pl.BlockSpec((4, tile3), lambda i: (0, i)),
            pl.BlockSpec((G, topk), lambda i: (0, 0)),
            pl.BlockSpec((G, topk), lambda i: (0, 0)),
        ],
        out_specs=pl.BlockSpec((1, tile3), lambda i: (0, i)),
        out_shape=jax.ShapeDtypeStruct((1, N), jnp.float32),
        compiler_params=cparams,
    )(gt4, anch_t, idxs, cand_w)

    return w2d[0, :]


if __name__ == "__main__":
    # Small deterministic example shapes (anchors, gts, topk, num classes).
    # N is deliberately NOT a multiple of the tile to exercise the ragged last tile.
    N, G, K, C = 1900, 8, 9, 128
    alpha, low_bound = 0.8, 0.0

    key = jax.random.PRNGKey(0)
    keys = jax.random.split(key, 10)

    def make_boxes(kxy, kwh, n, wh_lo, wh_hi):
        xy = jax.random.uniform(kxy, (n, 2), minval=0.0, maxval=48.0)
        wh = jax.random.uniform(kwh, (n, 2), minval=wh_lo, maxval=wh_hi)
        return jnp.concatenate([xy, xy + wh], axis=-1).astype(jnp.float32)

    bboxes = make_boxes(keys[0], keys[1], N, 4.0, 16.0)        # anchor boxes
    bbox_preds = make_boxes(keys[2], keys[3], N, 4.0, 16.0)    # predicted boxes
    gt_bboxes = make_boxes(keys[4], keys[5], G, 12.0, 24.0)    # ground-truth boxes
    cls_scores = jax.random.normal(keys[6], (N, C), jnp.float32)
    gt_labels = jax.random.randint(keys[7], (G,), 0, C)
    noise_x = jax.random.uniform(keys[8], (G, K), jnp.float32)  # U[0,1) (torch.rand analog)
    noise_y = jax.random.uniform(keys[9], (G, K), jnp.float32)

    w = pgw_anchor_assign(bboxes, cls_scores, bbox_preds, gt_bboxes, gt_labels,
                          noise_x, noise_y, alpha=alpha, topk=K,
                          low_bound=low_bound, tile_n=1024, tile_n3=8192)
    w = jax.block_until_ready(w)
    assert w.shape == (N,) and w.dtype == jnp.float32
    assert bool(jnp.all(jnp.isfinite(w)))
    assert bool(jnp.all(w >= 0.0))
    print("KERNEL_OK")
</pallas_src>

<mosaic_0001>
module attributes {stable_mosaic.version = 11 : i64} {
  func.func @_cost_kernel(%arg0: i32, %arg1: memref<8x128xf32, #tpu.memory_space<vmem>>, %arg2: memref<8x4xf32, #tpu.memory_space<vmem>>, %arg3: memref<4x1024xf32, #tpu.memory_space<vmem>>, %arg4: memref<1024x128xf32, #tpu.memory_space<vmem>>, %arg5: memref<8x1024xf32, #tpu.memory_space<vmem>>) attributes {dimension_semantics = [#tpu.dimension_semantics<parallel>], iteration_bounds = array<i64: 2>, scalar_prefetch = 0 : i64, scratch_operands = 0 : i64, tpu.core_type = #tpu.core_type<tc>, window_params = [{pipeline_mode = #tpu.pipeline_mode<synchronous>, transform_indices = @transform_0, window_bounds = array<i64: 8, 128>}, {pipeline_mode = #tpu.pipeline_mode<synchronous>, transform_indices = @transform_1, window_bounds = array<i64: 8, 4>}, {transform_indices = @transform_2, window_bounds = array<i64: 4, 1024>}, {transform_indices = @transform_3, window_bounds = array<i64: 1024, 128>}, {transform_indices = @transform_4, window_bounds = array<i64: 8, 1024>}]} {
    %c0 = arith.constant 0 : index
    %c0_0 = arith.constant 0 : index
    %0 = vector.load %arg3[%c0, %c0_0] : memref<4x1024xf32, #tpu.memory_space<vmem>>, vector<1x1024xf32>
    %c1 = arith.constant 1 : index
    %c0_1 = arith.constant 0 : index
    %1 = vector.load %arg3[%c1, %c0_1] : memref<4x1024xf32, #tpu.memory_space<vmem>>, vector<1x1024xf32>
    %c2 = arith.constant 2 : index
    %c0_2 = arith.constant 0 : index
    %2 = vector.load %arg3[%c2, %c0_2] : memref<4x1024xf32, #tpu.memory_space<vmem>>, vector<1x1024xf32>
    %c3 = arith.constant 3 : index
    %c0_3 = arith.constant 0 : index
    %3 = vector.load %arg3[%c3, %c0_3] : memref<4x1024xf32, #tpu.memory_space<vmem>>, vector<1x1024xf32>
    %c0_4 = arith.constant 0 : index
    %c0_5 = arith.constant 0 : index
    %4 = vector.load %arg2[%c0_4, %c0_5] : memref<8x4xf32, #tpu.memory_space<vmem>>, vector<8x1xf32>
    %c0_6 = arith.constant 0 : index
    %c1_7 = arith.constant 1 : index
    %5 = vector.load %arg2[%c0_6, %c1_7] : memref<8x4xf32, #tpu.memory_space<vmem>>, vector<8x1xf32>
    %c0_8 = arith.constant 0 : index
    %c2_9 = arith.constant 2 : index
    %6 = vector.load %arg2[%c0_8, %c2_9] : memref<8x4xf32, #tpu.memory_space<vmem>>, vector<8x1xf32>
    %c0_10 = arith.constant 0 : index
    %c3_11 = arith.constant 3 : index
    %7 = vector.load %arg2[%c0_10, %c3_11] : memref<8x4xf32, #tpu.memory_space<vmem>>, vector<8x1xf32>
    %8 = vector.broadcast %0 : vector<1x1024xf32> to vector<8x1024xf32>
    %9 = vector.broadcast %4 : vector<8x1xf32> to vector<8x1024xf32>
    %10 = arith.maximumf %8, %9 : vector<8x1024xf32>
    %11 = vector.broadcast %1 : vector<1x1024xf32> to vector<8x1024xf32>
    %12 = vector.broadcast %5 : vector<8x1xf32> to vector<8x1024xf32>
    %13 = arith.maximumf %11, %12 : vector<8x1024xf32>
    %14 = vector.broadcast %2 : vector<1x1024xf32> to vector<8x1024xf32>
    %15 = vector.broadcast %6 : vector<8x1xf32> to vector<8x1024xf32>
    %16 = arith.minimumf %14, %15 : vector<8x1024xf32>
    %17 = vector.broadcast %3 : vector<1x1024xf32> to vector<8x1024xf32>
    %18 = vector.broadcast %7 : vector<8x1xf32> to vector<8x1024xf32>
    %19 = arith.minimumf %17, %18 : vector<8x1024xf32>
    %20 = arith.subf %16, %10 : vector<8x1024xf32>
    %cst = arith.constant 0.000000e+00 : f32
    %21 = vector.broadcast %cst : f32 to vector<8x1024xf32>
    %22 = arith.maximumf %20, %21 : vector<8x1024xf32>
    %23 = arith.subf %19, %13 : vector<8x1024xf32>
    %cst_12 = arith.constant 0.000000e+00 : f32
    %24 = vector.broadcast %cst_12 : f32 to vector<8x1024xf32>
    %25 = arith.maximumf %23, %24 : vector<8x1024xf32>
    %26 = arith.mulf %22, %25 : vector<8x1024xf32>
    %27 = arith.subf %2, %0 : vector<1x1024xf32>
    %28 = arith.subf %3, %1 : vector<1x1024xf32>
    %29 = arith.mulf %27, %28 : vector<1x1024xf32>
    %30 = arith.subf %6, %4 : vector<8x1xf32>
    %31 = arith.subf %7, %5 : vector<8x1xf32>
    %32 = arith.mulf %30, %31 : vector<8x1xf32>
    %33 = vector.broadcast %29 : vector<1x1024xf32> to vector<8x1024xf32>
    %34 = vector.broadcast %32 : vector<8x1xf32> to vector<8x1024xf32>
    %35 = arith.addf %33, %34 : vector<8x1024xf32>
    %36 = arith.subf %35, %26 : vector<8x1024xf32>
    %cst_13 = arith.constant 9.99999997E-7 : f32
    %37 = vector.broadcast %cst_13 : f32 to vector<8x1024xf32>
    %38 = arith.maximumf %36, %37 : vector<8x1024xf32>
    %39 = tpu.reciprocal %38 {approx = true} : vector<8x1024xf32> -> vector<8x1024xf32>
    %40 = arith.mulf %26, %39 : vector<8x1024xf32>
    %c0_14 = arith.constant 0 : index
    %c0_15 = arith.constant 0 : index
    %41 = vector.load %arg1[%c0_14, %c0_15] : memref<8x128xf32, #tpu.memory_space<vmem>>, vector<8x128xf32>
    %c0_16 = arith.constant 0 : index
    %c0_17 = arith.constant 0 : index
    %42 = vector.load %arg4[%c0_16, %c0_17] : memref<1024x128xf32, #tpu.memory_space<vmem>>, vector<1024x128xf32>
    %cst_18 = arith.constant dense<0.000000e+00> : vector<8x1024xf32>
    %43 = tpu.matmul %41, %42, %cst_18 {dimension_numbers = #tpu.dot_dimension_numbers<[1], [1], [0], [0], [0, 0, 1, 0], [], []>} : vector<8x128xf32>, vector<1024x128xf32>, vector<8x1024xf32> -> vector<8x1024xf32>
    %cst_19 = arith.constant 0.000000e+00 : f32
    %44 = vector.broadcast %cst_19 : f32 to vector<8x1024xf32>
    %45 = arith.subf %44, %43 : vector<8x1024xf32>
    %cst_20 = arith.constant 0.000000e+00 : f32
    %46 = vector.broadcast %cst_20 : f32 to vector<8x1024xf32>
    %47 = arith.maximumf %45, %46 : vector<8x1024xf32>
    %48 = math.absf %43 : vector<8x1024xf32>
    %cst_21 = arith.constant 0.000000e+00 : f32
    %49 = vector.broadcast %cst_21 : f32 to vector<8x1024xf32>
    %50 = arith.subf %49, %48 : vector<8x1024xf32>
    %51 = math.exp %50 : vector<8x1024xf32>
    %cst_22 = arith.constant 1.000000e+00 : f32
    %52 = vector.broadcast %cst_22 : f32 to vector<8x1024xf32>
    %53 = arith.addf %52, %51 : vector<8x1024xf32>
    %54 = math.log %53 : vector<8x1024xf32>
    %55 = arith.addf %47, %54 : vector<8x1024xf32>
    %cst_23 = arith.constant 0.000000e+00 : f32
    %56 = vector.broadcast %cst_23 : f32 to vector<8x1024xf32>
    %57 = arith.subf %56, %55 : vector<8x1024xf32>
    %cst_24 = arith.constant 9.99999996E-13 : f32
    %58 = vector.broadcast %cst_24 : f32 to vector<8x1024xf32>
    %59 = arith.maximumf %40, %58 : vector<8x1024xf32>
    %60 = math.log %59 : vector<8x1024xf32>
    %cst_25 = arith.constant 2.000000e-01 : f32
    %61 = vector.broadcast %cst_25 : f32 to vector<8x1024xf32>
    %62 = arith.mulf %61, %57 : vector<8x1024xf32>
    %cst_26 = arith.constant 8.000000e-01 : f32
    %63 = vector.broadcast %cst_26 : f32 to vector<8x1024xf32>
    %64 = arith.mulf %63, %60 : vector<8x1024xf32>
    %65 = arith.addf %62, %64 : vector<8x1024xf32>
    %c0_27 = arith.constant 0 : index
    %c0_28 = arith.constant 0 : index
    %66 = vector.load %arg5[%c0_27, %c0_28] : memref<8x1024xf32, #tpu.memory_space<vmem>>, vector<8x1024xf32>
    tpu.vector_store %arg5[%c0_27, %c0_28], %65 {strides = array<i32>} : memref<8x1024xf32, #tpu.memory_space<vmem>>, vector<8x1024xf32>,
    return
  }
  func.func @transform_0(%arg0: i32) -> (i32, i32) {
    %c0_i32 = arith.constant 0 : i32
    %c0_i32_0 = arith.constant 0 : i32
    %c0_i32_1 = arith.constant 0 : i32
    return %c0_i32, %c0_i32_0 : i32, i32
  }
  func.func @transform_1(%arg0: i32) -> (i32, i32) {
    %c0_i32 = arith.constant 0 : i32
    %c0_i32_0 = arith.constant 0 : i32
    %c0_i32_1 = arith.constant 0 : i32
    return %c0_i32, %c0_i32_0 : i32, i32
  }
  func.func @transform_2(%arg0: i32) -> (i32, i32) {
    %c0_i32 = arith.constant 0 : i32
    %c0_i32_0 = arith.constant 0 : i32
    return %c0_i32, %arg0 : i32, i32
  }
  func.func @transform_3(%arg0: i32) -> (i32, i32) {
    %c0_i32 = arith.constant 0 : i32
    %c0_i32_0 = arith.constant 0 : i32
    return %arg0, %c0_i32 : i32, i32
  }
  func.func @transform_4(%arg0: i32) -> (i32, i32) {
    %c0_i32 = arith.constant 0 : i32
    %c0_i32_0 = arith.constant 0 : i32
    return %c0_i32, %arg0 : i32, i32
  }
}

</mosaic_0001>

<llo_original>
// kernel: tpu_custom_call.1
$region0: #{tpu_custom_call.1}
  #allocation0 [shape = 'u32[]', space=smem, size = 0x4, offset = 0x4, fixed_abs, tag = 'smem constant byte address 0x4 - core index']
  #allocation1 [shape = 'u32[144,128]{1,0:T(1,128)}', space=vmem, size = 0x12000, scoped, tag = 'internal scratch']
  %s0 = inlined_call_operand.vmem [shape: f32[8,128], index: 0, kind: input, shape index: {}]
  %s1 = inlined_call_operand.vmem [shape: f32[8,4], index: 1, kind: input, shape index: {}]
  %s2 = inlined_call_operand.hbm [shape: f32[4,1900], index: 2, kind: input, shape index: {}]
  %s3 = inlined_call_operand.hbm [shape: f32[1900,128], index: 3, kind: input, shape index: {}]
  %s4 = inlined_call_operand.hbm [shape: f32[8,1900], index: 4, kind: output, shape index: {}]
  %s5 = sld [smem:[#allocation0]]
  $region57: #{tpu_custom_call.1} parent=0
    _
  %s7 = ssub.s32 1, %s5
  %s8 = scalar_select 0, %s7, %s5
  $region1: #{tpu_custom_call.1} parent=0
    #allocation2 [shape = 'u8[32768]{0}', space=vmem, size = 0x8000, scoped, tag = 'input window, operand 2']
    #allocation3 [shape = 's32[2]{0}', space=sflag, size = 0x8, scoped, tag = 'scoped memory for tpu_custom_call.1']
    #allocation4 [shape = 's32[2]{0}', space=sflag, size = 0x8, scoped, tag = 'scoped memory for tpu_custom_call.1']
    #allocation5 [shape = 'u8[1048576]{0}', space=vmem, size = 0x100000, scoped, tag = 'input window, operand 3']
    #allocation6 [shape = 's32[2]{0}', space=sflag, size = 0x8, scoped, tag = 'scoped memory for tpu_custom_call.1']
    #allocation7 [shape = 'u8[65536]{0}', space=vmem, size = 0x10000, scoped, tag = 'output window, operand 0']
    %9 = vsyncpa [#allocation3], 0
    %s10 = scalar_lea.sflag [#allocation3], 1
    %11 = vsyncpa %s10, 0
    %12 = vsyncpa [#allocation6], 0
    %s13 = scalar_lea.sflag [#allocation6], 1
    %14 = vsyncpa %s13, 0
    %15 = vsyncpa [#allocation4], 0
    %s16 = scalar_lea.sflag [#allocation4], 1
    %17 = vsyncpa %s16, 0
    loop: start=0, step=1, limit=4
    $region2: #{tpu_custom_call.1} parent=1 // loop_pre_header
      _
    $region3: #{tpu_custom_call.1} parent=1 // loop_header
      %s19 = sphi 0, %s23
      %p20 = scmp.ge.s32.totalorder %s19, 4
      %s27 = sphi 0, %s27
      %s29 = sphi 0, %s27
      %s30 = sphi 0, %s29
      %s44 = sphi 0, %s30
      %s48 = sphi 0, %s48
      %s50 = sphi 0, %s48
      %s51 = sphi 0, %s50
      %s65 = sphi 0, %s51
      %s71 = sphi 0, %s73
      %s74 = sphi 0, %s71
      %s75 = sphi 0, %s74
      %s91 = sphi 0, %s75
      %s97 = sphi 0, %s99
      %s100 = sphi 0, %s97
      %s101 = sphi 0, %s100
      %s117 = sphi 0, %s101
      %s123 = sphi 0, %s125
      %s126 = sphi 0, %s123
      %s127 = sphi 0, %s126
      %s143 = sphi 0, %s127
    $region4: #{tpu_custom_call.1} parent=1 // loop_header_branch
      %22 = sbr.rel (%p20) target = $region8
    $region5: #{tpu_custom_call.1} parent=1 // loop_body
      %s24 = ssub.s32 %s19, 1
      %s25 = ssub.s32 %s19, 2
      %s26 = sadd.s32 %s19, 1
      %s28 = sadd.s32 %s27, 1
      %p31 = scmp.eq.s32.totalorder %s19, 1
      %p32 = scmp.ne.s32.totalorder %s27, %s29
      %p33 = scmp.eq.s32.totalorder %s19, 0
      %p34 = por %p32, %p33
      %p35 = scmp.ne.s32.totalorder %s27, %s29
      %p36 = scmp.eq.s32.totalorder %s24, 1
      %p37 = por %p35, %p36
      %p38 = scmp.ne.s32.totalorder %s29, %s30
      %p39 = scmp.eq.s32.totalorder %s24, 0
      %p40 = por %p38, %p39
      %p41 = scmp.ne.s32.totalorder %s29, %s30
      %p42 = scmp.eq.s32.totalorder %s25, 1
      %p43 = por %p41, %p42
      %p45 = scmp.ne.s32.totalorder %s30, %s44
      %p46 = scmp.eq.s32.totalorder %s25, 0
      %p47 = por %p45, %p46
      %s49 = sadd.s32 %s48, 1
      %p52 = scmp.eq.s32.totalorder %s19, 1
      %p53 = scmp.ne.s32.totalorder %s48, %s50
      %p54 = scmp.eq.s32.totalorder %s19, 0
      %p55 = por %p53, %p54
      %p56 = scmp.ne.s32.totalorder %s48, %s50
      %p57 = scmp.eq.s32.totalorder %s24, 1
      %p58 = por %p56, %p57
      %p59 = scmp.ne.s32.totalorder %s50, %s51
      %p60 = scmp.eq.s32.totalorder %s24, 0
      %p61 = por %p59, %p60
      %p62 = scmp.ne.s32.totalorder %s50, %s51
      %p63 = scmp.eq.s32.totalorder %s25, 1
      %p64 = por %p62, %p63
      %p66 = scmp.ne.s32.totalorder %s51, %s65
      %p67 = scmp.eq.s32.totalorder %s25, 0
      %p68 = por %p66, %p67
      %s69 = ssub.s32 %s19, %s26
      %p70 = scmp.eq.s32.totalorder %s69, 0
      %s72 = sadd.s32 %s71, 1
      %s73 = scalar_select %p70, %s71, %s72
      %p76 = pneg %p70
      %p77 = scmp.eq.s32.totalorder %s19, 1
      %p78 = por %p76, %p77
      %p79 = scmp.ne.s32.totalorder %s71, %s74
      %p80 = scmp.eq.s32.totalorder %s19, 0
      %p81 = por %p79, %p80
      %p82 = scmp.ne.s32.totalorder %s71, %s74
      %p83 = scmp.eq.s32.totalorder %s24, 1
      %p84 = por %p82, %p83
      %p85 = scmp.ne.s32.totalorder %s74, %s75
      %p86 = scmp.eq.s32.totalorder %s24, 0
      %p87 = por %p85, %p86
      %p88 = scmp.ne.s32.totalorder %s74, %s75
      %p89 = scmp.eq.s32.totalorder %s25, 1
      %p90 = por %p88, %p89
      %p92 = scmp.ne.s32.totalorder %s75, %s91
      %p93 = scmp.eq.s32.totalorder %s25, 0
      %p94 = por %p92, %p93
      %s95 = ssub.s32 %s19, %s26
      %p96 = scmp.eq.s32.totalorder %s95, 0
      %s98 = sadd.s32 %s97, 1
      %s99 = scalar_select %p96, %s97, %s98
      %p102 = pneg %p96
      %p103 = scmp.eq.s32.totalorder %s19, 1
      %p104 = por %p102, %p103
      %p105 = scmp.ne.s32.totalorder %s97, %s100
      %p106 = scmp.eq.s32.totalorder %s19, 0
      %p107 = por %p105, %p106
      %p108 = scmp.ne.s32.totalorder %s97, %s100
      %p109 = scmp.eq.s32.totalorder %s24, 1
      %p110 = por %p108, %p109
      %p111 = scmp.ne.s32.totalorder %s100, %s101
      %p112 = scmp.eq.s32.totalorder %s24, 0
      %p113 = por %p111, %p112
      %p114 = scmp.ne.s32.totalorder %s100, %s101
      %p115 = scmp.eq.s32.totalorder %s25, 1
      %p116 = por %p114, %p115
      %p118 = scmp.ne.s32.totalorder %s101, %s117
      %p119 = scmp.eq.s32.totalorder %s25, 0
      %p120 = por %p118, %p119
      %s121 = ssub.s32 %s19, %s26
      %p122 = scmp.eq.s32.totalorder %s121, 0
      %s124 = sadd.s32 %s123, 1
      %s125 = scalar_select %p122, %s123, %s124
      %p128 = pneg %p122
      %p129 = scmp.eq.s32.totalorder %s19, 1
      %p130 = por %p128, %p129
      %p131 = scmp.ne.s32.totalorder %s123, %s126
      %p132 = scmp.eq.s32.totalorder %s19, 0
      %p133 = por %p131, %p132
      %p134 = scmp.ne.s32.totalorder %s123, %s126
      %p135 = scmp.eq.s32.totalorder %s24, 1
      %p136 = por %p134, %p135
      %p137 = scmp.ne.s32.totalorder %s126, %s127
      %p138 = scmp.eq.s32.totalorder %s24, 0
      %p139 = por %p137, %p138
      %p140 = scmp.ne.s32.totalorder %s126, %s127
      %p141 = scmp.eq.s32.totalorder %s25, 1
      %p142 = por %p140, %p141
      %p144 = scmp.ne.s32.totalorder %s127, %s143
      %p145 = scmp.eq.s32.totalorder %s25, 0
      %p146 = por %p144, %p145
      %p147 = scmp.le.s32.totalorder 1, %s19
      %p148 = scmp.lt.s32.totalorder %s19, 3
      %p149 = pnand %p147, %p148
      %p150 = pneg %p149
      // Predicated region
      $region9: #{tpu_custom_call.1} parent=5 // pred_check
        _
      $region10: #{tpu_custom_call.1} parent=5 // pred_check_branch
        %152 = sbr.rel (%p149) target = $region12
      $region11: #{tpu_custom_call.1} parent=5 // pred_region
        %s153 = ssub.s32 %s19, 1
        // Predicated region
        $region13: #{tpu_custom_call.1} parent=11 // pred_check
          %p154 = pneg %p40
        $region14: #{tpu_custom_call.1} parent=11 // pred_check_branch
          %156 = sbr.rel (%p154) target = $region16
        $region15: #{tpu_custom_call.1} parent=11 // pred_region
          _
        $region16: #{tpu_custom_call.1} parent=11 // pred_fallthru
          _
        // Predicated region
        $region17: #{tpu_custom_call.1} parent=11 // pred_check
          %p157 = pneg %p61
        $region18: #{tpu_custom_call.1} parent=11 // pred_check_branch
          %159 = sbr.rel (%p157) target = $region20
        $region19: #{tpu_custom_call.1} parent=11 // pred_region
          _
        $region20: #{tpu_custom_call.1} parent=11 // pred_fallthru
          _
      $region12: #{tpu_custom_call.1} parent=5 // pred_fallthru
        _
      %p160 = scmp.lt.s32.totalorder %s19, 2
      // Predicated region
      $region21: #{tpu_custom_call.1} parent=5 // pred_check
        %p161 = pneg %p160
      $region22: #{tpu_custom_call.1} parent=5 // pred_check_branch
        %163 = sbr.rel (%p161) target = $region24
      $region23: #{tpu_custom_call.1} parent=5 // pred_region
        // Predicated region
        $region25: #{tpu_custom_call.1} parent=23 // pred_check
          %p164 = pneg %p81
        $region26: #{tpu_custom_call.1} parent=23 // pred_check_branch
          %166 = sbr.rel (%p164) target = $region28
        $region27: #{tpu_custom_call.1} parent=23 // pred_region
          %s167 = sand.u32 %s71, 1
          %s168 = scalar_lea.sflag [#allocation3], %s167
          %s169 = sand.u32 %s71, 1
          %s170 = smul.addr %s169, 32
          %s171 = scalar_lea.vmem [#allocation2], %s170
          %s172 = smul.u32 8, %s19
          %s173 = ssub.s32 15, %s172
          %p174 = scmp.lt.s32.totalorder %s173, 8
          %s175 = scalar_select %p174, %s173, 8
          %s176 = smul.u32 64, %s175
          %s178 = ssub.s32 512, %s176
          %179 = vsyncadd %s168, %s178
          %p180 = scmp.ne.s32.totalorder 0, %s176
          %s181 = smul.addr %s172, 64
          %s182 = scalar_lea.hbm %s2, %s181
          %s183 = smul.u32 %s175, 4
          %s184 = sshll.u32 %s183, 4
          %s185 = sshll.u32 %s171, 4
          %s186 = int_to_ptr.vmem [resolvable:$true] %s185
          %188 = dma.hbm_to_vmem [thread:$0]  (%p180), %s182, %s184, %s186, %s168
        $region28: #{tpu_custom_call.1} parent=23 // pred_fallthru
          _
        // Predicated region
        $region29: #{tpu_custom_call.1} parent=23 // pred_check
          %p189 = pneg %p107
        $region30: #{tpu_custom_call.1} parent=23 // pred_check_branch
          %191 = sbr.rel (%p189) target = $region32
        $region31: #{tpu_custom_call.1} parent=23 // pred_region
          %s192 = sand.u32 %s97, 1
          %s193 = scalar_lea.sflag [#allocation6], %s192
          %s194 = sand.u32 %s97, 1
          %s195 = smul.addr %s194, 1024
          %s196 = scalar_lea.vmem [#allocation5], %s195
          %s197 = smul.u32 128, %s19
          %s198 = ssub.s32 238, %s197
          %p199 = scmp.lt.s32.totalorder %s198, 128
          %s200 = scalar_select %p199, %s198, 128
          %s201 = smul.u32 128, %s200
          %s203 = ssub.s32 16384, %s201
          %204 = vsyncadd %s193, %s203
          %p205 = scmp.ne.s32.totalorder 0, %s201
          %s206 = smul.addr %s197, 128
          %s207 = scalar_lea.hbm %s3, %s206
          %s208 = smul.u32 8, %s200
          %s209 = sshll.u32 %s196, 4
          %s210 = int_to_ptr.vmem [resolvable:$true] %s209
          %s211 = sshll.u32 %s208, 4
          %215 = dma.hbm_to_vmem [thread:$0]  (%p205), %s207, %s211, %s210, %s193, 128, 128, 8
        $region32: #{tpu_custom_call.1} parent=23 // pred_fallthru
          _
      $region24: #{tpu_custom_call.1} parent=5 // pred_fallthru
        _
      %p216 = scmp.le.s32.totalorder 1, %s19
      %p217 = scmp.lt.s32.totalorder %s19, 3
      %p218 = pnand %p216, %p217
      %p219 = pneg %p218
      // Predicated region
      $region33: #{tpu_custom_call.1} parent=5 // pred_check
        _
      $region34: #{tpu_custom_call.1} parent=5 // pred_check_branch
        %221 = sbr.rel (%p218) target = $region36
      $region35: #{tpu_custom_call.1} parent=5 // pred_region
        %s222 = ssub.s32 %s19, 1
        %s223 = sand.u32 %s74, 1
        %s224 = scalar_lea.sflag [#allocation3], %s223
        %s225 = sand.u32 %s74, 1
        %s226 = smul.addr %s225, 32
        %s227 = scalar_lea.vmem [#allocation2], %s226
        // Predicated region
        $region37: #{tpu_custom_call.1} parent=35 // pred_check
          %p228 = pneg %p87
        $region38: #{tpu_custom_call.1} parent=35 // pred_check_branch
          %230 = sbr.rel (%p228) target = $region40
        $region39: #{tpu_custom_call.1} parent=35 // pred_region
          %231 = dma.done %s224, 512
        $region40: #{tpu_custom_call.1} parent=35 // pred_fallthru
          _
        %s232 = sand.u32 %s100, 1
        %s233 = scalar_lea.sflag [#allocation6], %s232
        %s234 = sand.u32 %s100, 1
        %s235 = smul.addr %s234, 1024
        %s236 = scalar_lea.vmem [#allocation5], %s235
        // Predicated region
        $region41: #{tpu_custom_call.1} parent=35 // pred_check
          %p237 = pneg %p113
        $region42: #{tpu_custom_call.1} parent=35 // pred_check_branch
          %239 = sbr.rel (%p237) target = $region44
        $region43: #{tpu_custom_call.1} parent=35 // pred_region
          %240 = dma.done %s233, 16384
        $region44: #{tpu_custom_call.1} parent=35 // pred_fallthru
          _
        %p241 = pneg %p40
        %p242 = pneg %p37
        %p243 = pneg %p61
        %p244 = pneg %p58
        %s245 = sand.u32 %s74, 1
        %s246 = scalar_lea.sflag [#allocation3], %s245
        %s247 = sand.u32 %s74, 1
        %s248 = smul.addr %s247, 32
        %s249 = scalar_lea.vmem [#allocation2], %s248
        %p250 = pneg %p87
        %p251 = pneg %p84
        %s252 = sand.u32 %s100, 1
        %s253 = scalar_lea.sflag [#allocation6], %s252
        %s254 = sand.u32 %s100, 1
        %s255 = smul.addr %s254, 1024
        %s256 = scalar_lea.vmem [#allocation5], %s255
        %p257 = pneg %p113
        %p258 = pneg %p110
        %p259 = pneg %p139
        %p260 = pneg %p136
        %s261 = sand.u32 %s126, 1
        %s262 = scalar_lea.sflag [#allocation4], %s261
        %s263 = sand.u32 %s126, 1
        %s264 = smul.addr %s263, 64
        %s265 = scalar_lea.vmem [#allocation7], %s264
        %s266 = smul.u32 8, %s24
        %s267 = ssub.s32 15, %s266
        %p268 = scmp.lt.s32.totalorder %s267, 8
        %s269 = scalar_select %p268, %s267, 8
        %s270 = smul.u32 64, %s269
        %s271 = smul.u32 128, %s24
        %s272 = ssub.s32 238, %s271
        %p273 = scmp.lt.s32.totalorder %s272, 128
        %s274 = scalar_select %p273, %s272, 128
        %s275 = smul.u32 128, %s274
        %s276 = smul.u32 8, %s24
        %s277 = ssub.s32 15, %s276
        %p278 = scmp.lt.s32.totalorder %s277, 8
        %s279 = scalar_select %p278, %s277, 8
        %s280 = smul.u32 128, %s279
        %v281 = vld [vmem:[%s227] ss:$4 sm:$0xff]
        %s282 = scalar_lea.vmem %s227, 1 [#allocation2]
        %v283 = vld [vmem:[%s282] ss:$4 sm:$0xff]
        %s284 = scalar_lea.vmem %s227, 2 [#allocation2]
        %v285 = vld [vmem:[%s284] ss:$4 sm:$0xff]
        %s286 = scalar_lea.vmem %s227, 3 [#allocation2]
        %v287 = vld [vmem:[%s286] ss:$4 sm:$0xff]
        %v288 = vld [vmem:[%s1] sm:$0xff]
        %v290 = vlaneseq
        %v291 = vshrl.u32 %v290, 7
        %v292 = vsub.s32 0, %v291
        %v293 = vrot.slane %v281, %v292
        %v294 = vlaneseq
        %v295 = vshrl.u32 %v294, 7
        %v296 = vsub.s32 1, %v295
        %v297 = vrot.slane %v281, %v296
        %v298 = vlaneseq
        %v299 = vshrl.u32 %v298, 7
        %v300 = vsub.s32 2, %v299
        %v301 = vrot.slane %v281, %v300
        %v302 = vlaneseq
        %v303 = vshrl.u32 %v302, 7
        %v304 = vsub.s32 3, %v303
        %v305 = vrot.slane %v281, %v304
        %v306 = vlaneseq
        %v307 = vshrl.u32 %v306, 7
        %v308 = vsub.s32 4, %v307
        %v309 = vrot.slane %v281, %v308
        %v310 = vlaneseq
        %v311 = vshrl.u32 %v310, 7
        %v312 = vsub.s32 5, %v311
        %v313 = vrot.slane %v281, %v312
        %v314 = vlaneseq
        %v315 = vshrl.u32 %v314, 7
        %v316 = vsub.s32 6, %v315
        %v317 = vrot.slane %v281, %v316
        %v318 = vlaneseq
        %v319 = vshrl.u32 %v318, 7
        %v320 = vsub.s32 7, %v319
        %v321 = vrot.slane %v281, %v320
        %331 = vset.pattern.permute.xlu0 0
        %332 = vperm.xlu0 %331, %v288
        %v333 = vpop.permute.xlu0 %332
        %v335 = vmax.f32 %v293, %v333
        %v336 = vmax.f32 %v297, %v333
        %v337 = vmax.f32 %v301, %v333
        %v338 = vmax.f32 %v305, %v333
        %v339 = vmax.f32 %v309, %v333
        %v340 = vmax.f32 %v313, %v333
        %v341 = vmax.f32 %v317, %v333
        %v342 = vmax.f32 %v321, %v333
        %v344 = vlaneseq
        %v345 = vshrl.u32 %v344, 7
        %v346 = vsub.s32 0, %v345
        %v347 = vrot.slane %v283, %v346
        %v348 = vlaneseq
        %v349 = vshrl.u32 %v348, 7
        %v350 = vsub.s32 1, %v349
        %v351 = vrot.slane %v283, %v350
        %v352 = vlaneseq
        %v353 = vshrl.u32 %v352, 7
        %v354 = vsub.s32 2, %v353
        %v355 = vrot.slane %v283, %v354
        %v356 = vlaneseq
        %v357 = vshrl.u32 %v356, 7
        %v358 = vsub.s32 3, %v357
        %v359 = vrot.slane %v283, %v358
        %v360 = vlaneseq
        %v361 = vshrl.u32 %v360, 7
        %v362 = vsub.s32 4, %v361
        %v363 = vrot.slane %v283, %v362
        %v364 = vlaneseq
        %v365 = vshrl.u32 %v364, 7
        %v366 = vsub.s32 5, %v365
        %v367 = vrot.slane %v283, %v366
        %v368 = vlaneseq
        %v369 = vshrl.u32 %v368, 7
        %v370 = vsub.s32 6, %v369
        %v371 = vrot.slane %v283, %v370
        %v372 = vlaneseq
        %v373 = vshrl.u32 %v372, 7
        %v374 = vsub.s32 7, %v373
        %v375 = vrot.slane %v283, %v374
        %384 = vset.pattern.permute.xlu0 1
        %385 = vperm.xlu0 %384, %v288
        %v386 = vpop.permute.xlu0 %385
        %v388 = vmax.f32 %v347, %v386
        %v389 = vmax.f32 %v351, %v386
        %v390 = vmax.f32 %v355, %v386
        %v391 = vmax.f32 %v359, %v386
        %v392 = vmax.f32 %v363, %v386
        %v393 = vmax.f32 %v367, %v386
        %v394 = vmax.f32 %v371, %v386
        %v395 = vmax.f32 %v375, %v386
        %v397 = vlaneseq
        %v398 = vshrl.u32 %v397, 7
        %v399 = vsub.s32 0, %v398
        %v400 = vrot.slane %v285, %v399
        %v401 = vlaneseq
        %v402 = vshrl.u32 %v401, 7
        %v403 = vsub.s32 1, %v402
        %v404 = vrot.slane %v285, %v403
        %v405 = vlaneseq
        %v406 = vshrl.u32 %v405, 7
        %v407 = vsub.s32 2, %v406
        %v408 = vrot.slane %v285, %v407
        %v409 = vlaneseq
        %v410 = vshrl.u32 %v409, 7
        %v411 = vsub.s32 3, %v410
        %v412 = vrot.slane %v285, %v411
        %v413 = vlaneseq
        %v414 = vshrl.u32 %v413, 7
        %v415 = vsub.s32 4, %v414
        %v416 = vrot.slane %v285, %v415
        %v417 = vlaneseq
        %v418 = vshrl.u32 %v417, 7
        %v419 = vsub.s32 5, %v418
        %v420 = vrot.slane %v285, %v419
        %v421 = vlaneseq
        %v422 = vshrl.u32 %v421, 7
        %v423 = vsub.s32 6, %v422
        %v424 = vrot.slane %v285, %v423
        %v425 = vlaneseq
        %v426 = vshrl.u32 %v425, 7
        %v427 = vsub.s32 7, %v426
        %v428 = vrot.slane %v285, %v427
        %437 = vset.pattern.permute.xlu0 2
        %438 = vperm.xlu0 %437, %v288
        %v439 = vpop.permute.xlu0 %438
        %v441 = vmin.f32 %v400, %v439
        %v442 = vmin.f32 %v404, %v439
        %v443 = vmin.f32 %v408, %v439
        %v444 = vmin.f32 %v412, %v439
        %v445 = vmin.f32 %v416, %v439
        %v446 = vmin.f32 %v420, %v439
        %v447 = vmin.f32 %v424, %v439
        %v448 = vmin.f32 %v428, %v439
        %v450 = vlaneseq
        %v451 = vshrl.u32 %v450, 7
        %v452 = vsub.s32 0, %v451
        %v453 = vrot.slane %v287, %v452
        %v454 = vlaneseq
        %v455 = vshrl.u32 %v454, 7
        %v456 = vsub.s32 1, %v455
        %v457 = vrot.slane %v287, %v456
        %v458 = vlaneseq
        %v459 = vshrl.u32 %v458, 7
        %v460 = vsub.s32 2, %v459
        %v461 = vrot.slane %v287, %v460
        %v462 = vlaneseq
        %v463 = vshrl.u32 %v462, 7
        %v464 = vsub.s32 3, %v463
        %v465 = vrot.slane %v287, %v464
        %v466 = vlaneseq
        %v467 = vshrl.u32 %v466, 7
        %v468 = vsub.s32 4, %v467
        %v469 = vrot.slane %v287, %v468
        %v470 = vlaneseq
        %v471 = vshrl.u32 %v470, 7
        %v472 = vsub.s32 5, %v471
        %v473 = vrot.slane %v287, %v472
        %v474 = vlaneseq
        %v475 = vshrl.u32 %v474, 7
        %v476 = vsub.s32 6, %v475
        %v477 = vrot.slane %v287, %v476
        %v478 = vlaneseq
        %v479 = vshrl.u32 %v478, 7
        %v480 = vsub.s32 7, %v479
        %v481 = vrot.slane %v287, %v480
        %490 = vset.pattern.permute.xlu0 3
        %491 = vperm.xlu0 %490, %v288
        %v492 = vpop.permute.xlu0 %491
        %v494 = vmin.f32 %v453, %v492
        %v495 = vmin.f32 %v457, %v492
        %v496 = vmin.f32 %v461, %v492
        %v497 = vmin.f32 %v465, %v492
        %v498 = vmin.f32 %v469, %v492
        %v499 = vmin.f32 %v473, %v492
        %v500 = vmin.f32 %v477, %v492
        %v501 = vmin.f32 %v481, %v492
        %v502 = vsub.f32 %v441, %v335
        %v503 = vsub.f32 %v442, %v336
        %v504 = vsub.f32 %v443, %v337
        %v505 = vsub.f32 %v444, %v338
        %v506 = vsub.f32 %v445, %v339
        %v507 = vsub.f32 %v446, %v340
        %v508 = vsub.f32 %v447, %v341
        %v509 = vsub.f32 %v448, %v342
        %v510 = vmax.f32 %v502, 0.0
        %v511 = vmax.f32 %v503, 0.0
        %v512 = vmax.f32 %v504, 0.0
        %v513 = vmax.f32 %v505, 0.0
        %v514 = vmax.f32 %v506, 0.0
        %v515 = vmax.f32 %v507, 0.0
        %v516 = vmax.f32 %v508, 0.0
        %v517 = vmax.f32 %v509, 0.0
        %v518 = vsub.f32 %v494, %v388
        %v519 = vsub.f32 %v495, %v389
        %v520 = vsub.f32 %v496, %v390
        %v521 = vsub.f32 %v497, %v391
        %v522 = vsub.f32 %v498, %v392
        %v523 = vsub.f32 %v499, %v393
        %v524 = vsub.f32 %v500, %v394
        %v525 = vsub.f32 %v501, %v395
        %v526 = vmax.f32 %v518, 0.0
        %v527 = vmax.f32 %v519, 0.0
        %v528 = vmax.f32 %v520, 0.0
        %v529 = vmax.f32 %v521, 0.0
        %v530 = vmax.f32 %v522, 0.0
        %v531 = vmax.f32 %v523, 0.0
        %v532 = vmax.f32 %v524, 0.0
        %v533 = vmax.f32 %v525, 0.0
        %v534 = vmul.f32 %v510, %v526
        %v535 = vmul.f32 %v511, %v527
        %v536 = vmul.f32 %v512, %v528
        %v537 = vmul.f32 %v513, %v529
        %v538 = vmul.f32 %v514, %v530
        %v539 = vmul.f32 %v515, %v531
        %v540 = vmul.f32 %v516, %v532
        %v541 = vmul.f32 %v517, %v533
        %v542 = vsub.f32 %v285, %v281
        %v543 = vsub.f32 %v287, %v283
        %v544 = vmul.f32 %v542, %v543
        %545 = vrot.lane.b32.xlu0 %v288, 2
        %v546 = vpop.permute.xlu0 %545
        %v548 = vsub.f32 %v288, %v546
        %550 = vrot.lane.b32.xlu0 %v548, 127
        %v551 = vpop.permute.xlu0 %550
        %v553 = vmul.f32 %v548, %v551
        %v555 = vlaneseq
        %v556 = vshrl.u32 %v555, 7
        %v557 = vsub.s32 0, %v556
        %v558 = vrot.slane %v544, %v557
        %v559 = vlaneseq
        %v560 = vshrl.u32 %v559, 7
        %v561 = vsub.s32 1, %v560
        %v562 = vrot.slane %v544, %v561
        %v563 = vlaneseq
        %v564 = vshrl.u32 %v563, 7
        %v565 = vsub.s32 2, %v564
        %v566 = vrot.slane %v544, %v565
        %v567 = vlaneseq
        %v568 = vshrl.u32 %v567, 7
        %v569 = vsub.s32 3, %v568
        %v570 = vrot.slane %v544, %v569
        %v571 = vlaneseq
        %v572 = vshrl.u32 %v571, 7
        %v573 = vsub.s32 4, %v572
        %v574 = vrot.slane %v544, %v573
        %v575 = vlaneseq
        %v576 = vshrl.u32 %v575, 7
        %v577 = vsub.s32 5, %v576
        %v578 = vrot.slane %v544, %v577
        %v579 = vlaneseq
        %v580 = vshrl.u32 %v579, 7
        %v581 = vsub.s32 6, %v580
        %v582 = vrot.slane %v544, %v581
        %v583 = vlaneseq
        %v584 = vshrl.u32 %v583, 7
        %v585 = vsub.s32 7, %v584
        %v586 = vrot.slane %v544, %v585
        %596 = vset.pattern.permute.xlu0 2
        %597 = vperm.xlu0 %596, %v553
        %v598 = vpop.permute.xlu0 %597
        %v600 = vadd.f32 %v558, %v598
        %v601 = vadd.f32 %v562, %v598
        %v602 = vadd.f32 %v566, %v598
        %v603 = vadd.f32 %v570, %v598
        %v604 = vadd.f32 %v574, %v598
        %v605 = vadd.f32 %v578, %v598
        %v606 = vadd.f32 %v582, %v598
        %v607 = vadd.f32 %v586, %v598
        %v608 = vsub.f32 %v600, %v534
        %v609 = vsub.f32 %v601, %v535
        %v610 = vsub.f32 %v602, %v536
        %v611 = vsub.f32 %v603, %v537
        %v612 = vsub.f32 %v604, %v538
        %v613 = vsub.f32 %v605, %v539
        %v614 = vsub.f32 %v606, %v540
        %v615 = vsub.f32 %v607, %v541
        %v616 = vmax.f32 %v608, 1e-06
        %v617 = vmax.f32 %v609, 1e-06
        %v618 = vmax.f32 %v610, 1e-06
        %v619 = vmax.f32 %v611, 1e-06
        %v620 = vmax.f32 %v612, 1e-06
        %v621 = vmax.f32 %v613, 1e-06
        %v622 = vmax.f32 %v614, 1e-06
        %v623 = vmax.f32 %v615, 1e-06
        %v624 = vrcp.pop %v616
        %v625 = vrcp.pop %v617
        %v626 = vrcp.pop %v618
        %v627 = vrcp.pop %v619
        %v628 = vrcp.pop %v620
        %v629 = vrcp.pop %v621
        %v630 = vrcp.pop %v622
        %v631 = vrcp.pop %v623
        %v632 = vmul.f32 %v534, %v624
        %v633 = vmul.f32 %v535, %v625
        %v634 = vmul.f32 %v536, %v626
        %v635 = vmul.f32 %v537, %v627
        %v636 = vmul.f32 %v538, %v628
        %v637 = vmul.f32 %v539, %v629
        %v638 = vmul.f32 %v540, %v630
        %v639 = vmul.f32 %v541, %v631
        %v640 = vld [vmem:[%s0] sm:$0xff]
        %v641 = vld [vmem:[%s236] sm:$0xff]
        %v642 = vld [vmem:[%s236 + $0x8] sm:$0xff]
        %v643 = vld [vmem:[%s236 + $0x10] sm:$0xff]
        %v644 = vld [vmem:[%s236 + $0x18] sm:$0xff]
        %v645 = vld [vmem:[%s236 + $0x20] sm:$0xff]
        %v646 = vld [vmem:[%s236 + $0x28] sm:$0xff]
        %v647 = vld [vmem:[%s236 + $0x30] sm:$0xff]
        %v648 = vld [vmem:[%s236 + $0x38] sm:$0xff]
        %v649 = vld [vmem:[%s236 + $0x40] sm:$0xff]
        %v650 = vld [vmem:[%s236 + $0x48] sm:$0xff]
        %v651 = vld [vmem:[%s236 + $0x50] sm:$0xff]
        %v652 = vld [vmem:[%s236 + $0x58] sm:$0xff]
        %v653 = vld [vmem:[%s236 + $0x60] sm:$0xff]
        %v654 = vld [vmem:[%s236 + $0x68] sm:$0xff]
        %v655 = vld [vmem:[%s236 + $0x70] sm:$0xff]
        %v656 = vld [vmem:[%s236 + $0x78] sm:$0xff]
        %v657 = vld [vmem:[%s236 + $0x80] sm:$0xff]
        %v658 = vld [vmem:[%s236 + $0x88] sm:$0xff]
        %v659 = vld [vmem:[%s236 + $0x90] sm:$0xff]
        %v660 = vld [vmem:[%s236 + $0x98] sm:$0xff]
        %v661 = vld [vmem:[%s236 + $0xa0] sm:$0xff]
        %v662 = vld [vmem:[%s236 + $0xa8] sm:$0xff]
        %v663 = vld [vmem:[%s236 + $0xb0] sm:$0xff]
        %v664 = vld [vmem:[%s236 + $0xb8] sm:$0xff]
        %v665 = vld [vmem:[%s236 + $0xc0] sm:$0xff]
        %v666 = vld [vmem:[%s236 + $0xc8] sm:$0xff]
        %v667 = vld [vmem:[%s236 + $0xd0] sm:$0xff]
        %v668 = vld [vmem:[%s236 + $0xd8] sm:$0xff]
        %v669 = vld [vmem:[%s236 + $0xe0] sm:$0xff]
        %v670 = vld [vmem:[%s236 + $0xe8] sm:$0xff]
        %v671 = vld [vmem:[%s236 + $0xf0] sm:$0xff]
        %v672 = vld [vmem:[%s236 + $0xf8] sm:$0xff]
        %v673 = vld [vmem:[%s236 + $0x100] sm:$0xff]
        %v674 = vld [vmem:[%s236 + $0x108] sm:$0xff]
        %v675 = vld [vmem:[%s236 + $0x110] sm:$0xff]
        %v676 = vld [vmem:[%s236 + $0x118] sm:$0xff]
        %v677 = vld [vmem:[%s236 + $0x120] sm:$0xff]
        %v678 = vld [vmem:[%s236 + $0x128] sm:$0xff]
        %v679 = vld [vmem:[%s236 + $0x130] sm:$0xff]
        %v680 = vld [vmem:[%s236 + $0x138] sm:$0xff]
        %v681 = vld [vmem:[%s236 + $0x140] sm:$0xff]
        %v682 = vld [vmem:[%s236 + $0x148] sm:$0xff]
        %v683 = vld [vmem:[%s236 + $0x150] sm:$0xff]
        %v684 = vld [vmem:[%s236 + $0x158] sm:$0xff]
        %v685 = vld [vmem:[%s236 + $0x160] sm:$0xff]
        %v686 = vld [vmem:[%s236 + $0x168] sm:$0xff]
        %v687 = vld [vmem:[%s236 + $0x170] sm:$0xff]
        %v688 = vld [vmem:[%s236 + $0x178] sm:$0xff]
        %v689 = vld [vmem:[%s236 + $0x180] sm:$0xff]
        %v690 = vld [vmem:[%s236 + $0x188] sm:$0xff]
        %v691 = vld [vmem:[%s236 + $0x190] sm:$0xff]
        %v692 = vld [vmem:[%s236 + $0x198] sm:$0xff]
        %v693 = vld [vmem:[%s236 + $0x1a0] sm:$0xff]
        %v694 = vld [vmem:[%s236 + $0x1a8] sm:$0xff]
        %v695 = vld [vmem:[%s236 + $0x1b0] sm:$0xff]
        %v696 = vld [vmem:[%s236 + $0x1b8] sm:$0xff]
        %v697 = vld [vmem:[%s236 + $0x1c0] sm:$0xff]
        %v698 = vld [vmem:[%s236 + $0x1c8] sm:$0xff]
        %v699 = vld [vmem:[%s236 + $0x1d0] sm:$0xff]
        %v700 = vld [vmem:[%s236 + $0x1d8] sm:$0xff]
        %v701 = vld [vmem:[%s236 + $0x1e0] sm:$0xff]
        %v702 = vld [vmem:[%s236 + $0x1e8] sm:$0xff]
        %v703 = vld [vmem:[%s236 + $0x1f0] sm:$0xff]
        %v704 = vld [vmem:[%s236 + $0x1f8] sm:$0xff]
        %v705 = vld [vmem:[%s236 + $0x200] sm:$0xff]
        %v706 = vld [vmem:[%s236 + $0x208] sm:$0xff]
        %v707 = vld [vmem:[%s236 + $0x210] sm:$0xff]
        %v708 = vld [vmem:[%s236 + $0x218] sm:$0xff]
        %v709 = vld [vmem:[%s236 + $0x220] sm:$0xff]
        %v710 = vld [vmem:[%s236 + $0x228] sm:$0xff]
        %v711 = vld [vmem:[%s236 + $0x230] sm:$0xff]
        %v712 = vld [vmem:[%s236 + $0x238] sm:$0xff]
        %v713 = vld [vmem:[%s236 + $0x240] sm:$0xff]
        %v714 = vld [vmem:[%s236 + $0x248] sm:$0xff]
        %v715 = vld [vmem:[%s236 + $0x250] sm:$0xff]
        %v716 = vld [vmem:[%s236 + $0x258] sm:$0xff]
        %v717 = vld [vmem:[%s236 + $0x260] sm:$0xff]
        %v718 = vld [vmem:[%s236 + $0x268] sm:$0xff]
        %v719 = vld [vmem:[%s236 + $0x270] sm:$0xff]
        %v720 = vld [vmem:[%s236 + $0x278] sm:$0xff]
        %v721 = vld [vmem:[%s236 + $0x280] sm:$0xff]
        %v722 = vld [vmem:[%s236 + $0x288] sm:$0xff]
        %v723 = vld [vmem:[%s236 + $0x290] sm:$0xff]
        %v724 = vld [vmem:[%s236 + $0x298] sm:$0xff]
        %v725 = vld [vmem:[%s236 + $0x2a0] sm:$0xff]
        %v726 = vld [vmem:[%s236 + $0x2a8] sm:$0xff]
        %v727 = vld [vmem:[%s236 + $0x2b0] sm:$0xff]
        %v728 = vld [vmem:[%s236 + $0x2b8] sm:$0xff]
        %v729 = vld [vmem:[%s236 + $0x2c0] sm:$0xff]
        %v730 = vld [vmem:[%s236 + $0x2c8] sm:$0xff]
        %v731 = vld [vmem:[%s236 + $0x2d0] sm:$0xff]
        %v732 = vld [vmem:[%s236 + $0x2d8] sm:$0xff]
        %v733 = vld [vmem:[%s236 + $0x2e0] sm:$0xff]
        %v734 = vld [vmem:[%s236 + $0x2e8] sm:$0xff]
        %v735 = vld [vmem:[%s236 + $0x2f0] sm:$0xff]
        %v736 = vld [vmem:[%s236 + $0x2f8] sm:$0xff]
        %v737 = vld [vmem:[%s236 + $0x300] sm:$0xff]
        %v738 = vld [vmem:[%s236 + $0x308] sm:$0xff]
        %v739 = vld [vmem:[%s236 + $0x310] sm:$0xff]
        %v740 = vld [vmem:[%s236 + $0x318] sm:$0xff]
        %v741 = vld [vmem:[%s236 + $0x320] sm:$0xff]
        %v742 = vld [vmem:[%s236 + $0x328] sm:$0xff]
        %v743 = vld [vmem:[%s236 + $0x330] sm:$0xff]
        %v744 = vld [vmem:[%s236 + $0x338] sm:$0xff]
        %v745 = vld [vmem:[%s236 + $0x340] sm:$0xff]
        %v746 = vld [vmem:[%s236 + $0x348] sm:$0xff]
        %v747 = vld [vmem:[%s236 + $0x350] sm:$0xff]
        %v748 = vld [vmem:[%s236 + $0x358] sm:$0xff]
        %v749 = vld [vmem:[%s236 + $0x360] sm:$0xff]
        %v750 = vld [vmem:[%s236 + $0x368] sm:$0xff]
        %v751 = vld [vmem:[%s236 + $0x370] sm:$0xff]
        %v752 = vld [vmem:[%s236 + $0x378] sm:$0xff]
        %v753 = vld [vmem:[%s236 + $0x380] sm:$0xff]
        %v754 = vld [vmem:[%s236 + $0x388] sm:$0xff]
        %v755 = vld [vmem:[%s236 + $0x390] sm:$0xff]
        %v756 = vld [vmem:[%s236 + $0x398] sm:$0xff]
        %v757 = vld [vmem:[%s236 + $0x3a0] sm:$0xff]
        %v758 = vld [vmem:[%s236 + $0x3a8] sm:$0xff]
        %v759 = vld [vmem:[%s236 + $0x3b0] sm:$0xff]
        %v760 = vld [vmem:[%s236 + $0x3b8] sm:$0xff]
        %v761 = vld [vmem:[%s236 + $0x3c0] sm:$0xff]
        %v762 = vld [vmem:[%s236 + $0x3c8] sm:$0xff]
        %v763 = vld [vmem:[%s236 + $0x3d0] sm:$0xff]
        %v764 = vld [vmem:[%s236 + $0x3d8] sm:$0xff]
        %v765 = vld [vmem:[%s236 + $0x3e0] sm:$0xff]
        %v766 = vld [vmem:[%s236 + $0x3e8] sm:$0xff]
        %v767 = vld [vmem:[%s236 + $0x3f0] sm:$0xff]
        %v768 = vld [vmem:[%s236 + $0x3f8] sm:$0xff]
        %769 = vmatprep.subr.mxu0 0.0
        %770 = vmatpush1.xpose.msra.mxu0 %v656
        %771 = vmatprep.subr.mxu0 0.0
        %772 = vmatpush1.xpose.msra.mxu0 %v655
        %773 = vmatprep.subr.mxu0 0.0
        %774 = vmatpush1.xpose.msra.mxu0 %v654
        %775 = vmatprep.subr.mxu0 0.0
        %776 = vmatpush1.xpose.msra.mxu0 %v653
        %777 = vmatprep.subr.mxu0 0.0
        %778 = vmatpush1.xpose.msra.mxu0 %v652
        %779 = vmatprep.subr.mxu0 0.0
        %780 = vmatpush1.xpose.msra.mxu0 %v651
        %781 = vmatprep.subr.mxu0 0.0
        %782 = vmatpush1.xpose.msra.mxu0 %v650
        %783 = vmatprep.subr.mxu0 0.0
        %784 = vmatpush1.xpose.msra.mxu0 %v649
        %785 = vmatprep.subr.mxu0 0.0
        %786 = vmatpush1.xpose.msra.mxu0 %v648
        %787 = vmatprep.subr.mxu0 0.0
        %788 = vmatpush1.xpose.msra.mxu0 %v647
        %789 = vmatprep.subr.mxu0 0.0
        %790 = vmatpush1.xpose.msra.mxu0 %v646
        %791 = vmatprep.subr.mxu0 0.0
        %792 = vmatpush1.xpose.msra.mxu0 %v645
        %793 = vmatprep.subr.mxu0 0.0
        %794 = vmatpush1.xpose.msra.mxu0 %v644
        %795 = vmatprep.subr.mxu0 0.0
        %796 = vmatpush1.xpose.msra.mxu0 %v643
        %797 = vmatprep.subr.mxu0 0.0
        %798 = vmatpush1.xpose.msra.mxu0 %v642
        %799 = vmatprep.subr.mxu0 0.0
        %800 = vmatpush1.xpose.msra.mxu0 %v641
        %801 = vmatprep.subr.mxu0 0.0
        %802 = vmatpush2.xpose.msra.mxu0 %v672
        %803 = vmatprep.subr.mxu0 0.0
        %804 = vmatpush2.xpose.msra.mxu0 %v671
        %805 = vmatprep.subr.mxu0 0.0
        %806 = vmatpush2.xpose.msra.mxu0 %v670
        %807 = vmatprep.subr.mxu0 0.0
        %808 = vmatpush2.xpose.msra.mxu0 %v669
        %809 = vmatprep.subr.mxu0 0.0
        %810 = vmatpush2.xpose.msra.mxu0 %v668
        %811 = vmatprep.subr.mxu0 0.0
        %812 = vmatpush2.xpose.msra.mxu0 %v667
        %813 = vmatprep.subr.mxu0 0.0
        %814 = vmatpush2.xpose.msra.mxu0 %v666
        %815 = vmatprep.subr.mxu0 0.0
        %816 = vmatpush2.xpose.msra.mxu0 %v665
        %817 = vmatprep.subr.mxu0 0.0
        %818 = vmatpush2.xpose.msra.mxu0 %v664
        %819 = vmatprep.subr.mxu0 0.0
        %820 = vmatpush2.xpose.msra.mxu0 %v663
        %821 = vmatprep.subr.mxu0 0.0
        %822 = vmatpush2.xpose.msra.mxu0 %v662
        %823 = vmatprep.subr.mxu0 0.0
        %824 = vmatpush2.xpose.msra.mxu0 %v661
        %825 = vmatprep.subr.mxu0 0.0
        %826 = vmatpush2.xpose.msra.mxu0 %v660
        %827 = vmatprep.subr.mxu0 0.0
        %828 = vmatpush2.xpose.msra.mxu0 %v659
        %829 = vmatprep.subr.mxu0 0.0
        %830 = vmatpush2.xpose.msra.mxu0 %v658
        %831 = vmatprep.subr.mxu0 0.0
        %832 = vmatpush2.xpose.msra.mxu0 %v657
        %833 = vmatprep.mubr.f32.mxu0 0.0
        %834 = vmatmul.mubr.f32.gmra.mxu0 %v640
        %v835 = vpop.f32.mrf.mxu0
        %v836 = vadd.f32 0.0, %v835
        %v837 = vpop.f32.mrf.mxu0
        %v838 = vadd.f32 0.0, %v837
        %839 = vdwg.mxu0
        %840 = vmatprep.subr.mxu0 0.0
        %841 = vmatpush1.xpose.msra.mxu0 %v688
        %842 = vmatprep.subr.mxu0 0.0
        %843 = vmatpush1.xpose.msra.mxu0 %v687
        %844 = vmatprep.subr.mxu0 0.0
        %845 = vmatpush1.xpose.msra.mxu0 %v686
        %846 = vmatprep.subr.mxu0 0.0
        %847 = vmatpush1.xpose.msra.mxu0 %v685
        %848 = vmatprep.subr.mxu0 0.0
        %849 = vmatpush1.xpose.msra.mxu0 %v684
        %850 = vmatprep.subr.mxu0 0.0
        %851 = vmatpush1.xpose.msra.mxu0 %v683
        %852 = vmatprep.subr.mxu0 0.0
        %853 = vmatpush1.xpose.msra.mxu0 %v682
        %854 = vmatprep.subr.mxu0 0.0
        %855 = vmatpush1.xpose.msra.mxu0 %v681
        %856 = vmatprep.subr.mxu0 0.0
        %857 = vmatpush1.xpose.msra.mxu0 %v680
        %858 = vmatprep.subr.mxu0 0.0
        %859 = vmatpush1.xpose.msra.mxu0 %v679
        %860 = vmatprep.subr.mxu0 0.0
        %861 = vmatpush1.xpose.msra.mxu0 %v678
        %862 = vmatprep.subr.mxu0 0.0
        %863 = vmatpush1.xpose.msra.mxu0 %v677
        %864 = vmatprep.subr.mxu0 0.0
        %865 = vmatpush1.xpose.msra.mxu0 %v676
        %866 = vmatprep.subr.mxu0 0.0
        %867 = vmatpush1.xpose.msra.mxu0 %v675
        %868 = vmatprep.subr.mxu0 0.0
        %869 = vmatpush1.xpose.msra.mxu0 %v674
        %870 = vmatprep.subr.mxu0 0.0
        %871 = vmatpush1.xpose.msra.mxu0 %v673
        %872 = vmatprep.subr.mxu0 0.0
        %873 = vmatpush2.xpose.msra.mxu0 %v704
        %874 = vmatprep.subr.mxu0 0.0
        %875 = vmatpush2.xpose.msra.mxu0 %v703
        %876 = vmatprep.subr.mxu0 0.0
        %877 = vmatpush2.xpose.msra.mxu0 %v702
        %878 = vmatprep.subr.mxu0 0.0
        %879 = vmatpush2.xpose.msra.mxu0 %v701
        %880 = vmatprep.subr.mxu0 0.0
        %881 = vmatpush2.xpose.msra.mxu0 %v700
        %882 = vmatprep.subr.mxu0 0.0
        %883 = vmatpush2.xpose.msra.mxu0 %v699
        %884 = vmatprep.subr.mxu0 0.0
        %885 = vmatpush2.xpose.msra.mxu0 %v698
        %886 = vmatprep.subr.mxu0 0.0
        %887 = vmatpush2.xpose.msra.mxu0 %v697
        %888 = vmatprep.subr.mxu0 0.0
        %889 = vmatpush2.xpose.msra.mxu0 %v696
        %890 = vmatprep.subr.mxu0 0.0
        %891 = vmatpush2.xpose.msra.mxu0 %v695
        %892 = vmatprep.subr.mxu0 0.0
        %893 = vmatpush2.xpose.msra.mxu0 %v694
        %894 = vmatprep.subr.mxu0 0.0
        %895 = vmatpush2.xpose.msra.mxu0 %v693
        %896 = vmatprep.subr.mxu0 0.0
        %897 = vmatpush2.xpose.msra.mxu0 %v692
        %898 = vmatprep.subr.mxu0 0.0
        %899 = vmatpush2.xpose.msra.mxu0 %v691
        %900 = vmatprep.subr.mxu0 0.0
        %901 = vmatpush2.xpose.msra.mxu0 %v690
        %902 = vmatprep.subr.mxu0 0.0
        %903 = vmatpush2.xpose.msra.mxu0 %v689
        %904 = vmatprep.mubr.f32.mxu0 0.0
        %905 = vmatmul.mubr.f32.gmra.mxu0 %v640
        %v906 = vpop.f32.mrf.mxu0
        %v907 = vadd.f32 0.0, %v906
        %v908 = vpop.f32.mrf.mxu0
        %v909 = vadd.f32 0.0, %v908
        %910 = vdwg.mxu0
        %911 = vmatprep.subr.mxu0 0.0
        %912 = vmatpush1.xpose.msra.mxu0 %v720
        %913 = vmatprep.subr.mxu0 0.0
        %914 = vmatpush1.xpose.msra.mxu0 %v719
        %915 = vmatprep.subr.mxu0 0.0
        %916 = vmatpush1.xpose.msra.mxu0 %v718
        %917 = vmatprep.subr.mxu0 0.0
        %918 = vmatpush1.xpose.msra.mxu0 %v717
        %919 = vmatprep.subr.mxu0 0.0
        %920 = vmatpush1.xpose.msra.mxu0 %v716
        %921 = vmatprep.subr.mxu0 0.0
        %922 = vmatpush1.xpose.msra.mxu0 %v715
        %923 = vmatprep.subr.mxu0 0.0
        %924 = vmatpush1.xpose.msra.mxu0 %v714
        %925 = vmatprep.subr.mxu0 0.0
        %926 = vmatpush1.xpose.msra.mxu0 %v713
        %927 = vmatprep.subr.mxu0 0.0
        %928 = vmatpush1.xpose.msra.mxu0 %v712
        %929 = vmatprep.subr.mxu0 0.0
        %930 = vmatpush1.xpose.msra.mxu0 %v711
        %931 = vmatprep.subr.mxu0 0.0
        %932 = vmatpush1.xpose.msra.mxu0 %v710
        %933 = vmatprep.subr.mxu0 0.0
        %934 = vmatpush1.xpose.msra.mxu0 %v709
        %935 = vmatprep.subr.mxu0 0.0
        %936 = vmatpush1.xpose.msra.mxu0 %v708
        %937 = vmatprep.subr.mxu0 0.0
        %938 = vmatpush1.xpose.msra.mxu0 %v707
        %939 = vmatprep.subr.mxu0 0.0
        %940 = vmatpush1.xpose.msra.mxu0 %v706
        %941 = vmatprep.subr.mxu0 0.0
        %942 = vmatpush1.xpose.msra.mxu0 %v705
        %943 = vmatprep.subr.mxu0 0.0
        %944 = vmatpush2.xpose.msra.mxu0 %v736
        %945 = vmatprep.subr.mxu0 0.0
        %946 = vmatpush2.xpose.msra.mxu0 %v735
        %947 = vmatprep.subr.mxu0 0.0
        %948 = vmatpush2.xpose.msra.mxu0 %v734
        %949 = vmatprep.subr.mxu0 0.0
        %950 = vmatpush2.xpose.msra.mxu0 %v733
        %951 = vmatprep.subr.mxu0 0.0
        %952 = vmatpush2.xpose.msra.mxu0 %v732
        %953 = vmatprep.subr.mxu0 0.0
        %954 = vmatpush2.xpose.msra.mxu0 %v731
        %955 = vmatprep.subr.mxu0 0.0
        %956 = vmatpush2.xpose.msra.mxu0 %v730
        %957 = vmatprep.subr.mxu0 0.0
        %958 = vmatpush2.xpose.msra.mxu0 %v729
        %959 = vmatprep.subr.mxu0 0.0
        %960 = vmatpush2.xpose.msra.mxu0 %v728
        %961 = vmatprep.subr.mxu0 0.0
        %962 = vmatpush2.xpose.msra.mxu0 %v727
        %963 = vmatprep.subr.mxu0 0.0
        %964 = vmatpush2.xpose.msra.mxu0 %v726
        %965 = vmatprep.subr.mxu0 0.0
        %966 = vmatpush2.xpose.msra.mxu0 %v725
        %967 = vmatprep.subr.mxu0 0.0
        %968 = vmatpush2.xpose.msra.mxu0 %v724
        %969 = vmatprep.subr.mxu0 0.0
        %970 = vmatpush2.xpose.msra.mxu0 %v723
        %971 = vmatprep.subr.mxu0 0.0
        %972 = vmatpush2.xpose.msra.mxu0 %v722
        %973 = vmatprep.subr.mxu0 0.0
        %974 = vmatpush2.xpose.msra.mxu0 %v721
        %975 = vmatprep.mubr.f32.mxu0 0.0
        %976 = vmatmul.mubr.f32.gmra.mxu0 %v640
        %v977 = vpop.f32.mrf.mxu0
        %v978 = vadd.f32 0.0, %v977
        %v979 = vpop.f32.mrf.mxu0
        %v980 = vadd.f32 0.0, %v979
        %981 = vdwg.mxu0
        %982 = vmatprep.subr.mxu0 0.0
        %983 = vmatpush1.xpose.msra.mxu0 %v752
        %984 = vmatprep.subr.mxu0 0.0
        %985 = vmatpush1.xpose.msra.mxu0 %v751
        %986 = vmatprep.subr.mxu0 0.0
        %987 = vmatpush1.xpose.msra.mxu0 %v750
        %988 = vmatprep.subr.mxu0 0.0
        %989 = vmatpush1.xpose.msra.mxu0 %v749
        %990 = vmatprep.subr.mxu0 0.0
        %991 = vmatpush1.xpose.msra.mxu0 %v748
        %992 = vmatprep.subr.mxu0 0.0
        %993 = vmatpush1.xpose.msra.mxu0 %v747
        %994 = vmatprep.subr.mxu0 0.0
        %995 = vmatpush1.xpose.msra.mxu0 %v746
        %996 = vmatprep.subr.mxu0 0.0
        %997 = vmatpush1.xpose.msra.mxu0 %v745
        %998 = vmatprep.subr.mxu0 0.0
        %999 = vmatpush1.xpose.msra.mxu0 %v744
        %1000 = vmatprep.subr.mxu0 0.0
        %1001 = vmatpush1.xpose.msra.mxu0 %v743
        %1002 = vmatprep.subr.mxu0 0.0
        %1003 = vmatpush1.xpose.msra.mxu0 %v742
        %1004 = vmatprep.subr.mxu0 0.0
        %1005 = vmatpush1.xpose.msra.mxu0 %v741
        %1006 = vmatprep.subr.mxu0 0.0
        %1007 = vmatpush1.xpose.msra.mxu0 %v740
        %1008 = vmatprep.subr.mxu0 0.0
        %1009 = vmatpush1.xpose.msra.mxu0 %v739
        %1010 = vmatprep.subr.mxu0 0.0
        %1011 = vmatpush1.xpose.msra.mxu0 %v738
        %1012 = vmatprep.subr.mxu0 0.0
        %1013 = vmatpush1.xpose.msra.mxu0 %v737
        %1014 = vmatprep.subr.mxu0 0.0
        %1015 = vmatpush2.xpose.msra.mxu0 %v768
        %1016 = vmatprep.subr.mxu0 0.0
        %1017 = vmatpush2.xpose.msra.mxu0 %v767
        %1018 = vmatprep.subr.mxu0 0.0
        %1019 = vmatpush2.xpose.msra.mxu0 %v766
        %1020 = vmatprep.subr.mxu0 0.0
        %1021 = vmatpush2.xpose.msra.mxu0 %v765
        %1022 = vmatprep.subr.mxu0 0.0
        %1023 = vmatpush2.xpose.msra.mxu0 %v764
        %1024 = vmatprep.subr.mxu0 0.0
        %1025 = vmatpush2.xpose.msra.mxu0 %v763
        %1026 = vmatprep.subr.mxu0 0.0
        %1027 = vmatpush2.xpose.msra.mxu0 %v762
        %1028 = vmatprep.subr.mxu0 0.0
        %1029 = vmatpush2.xpose.msra.mxu0 %v761
        %1030 = vmatprep.subr.mxu0 0.0
        %1031 = vmatpush2.xpose.msra.mxu0 %v760
        %1032 = vmatprep.subr.mxu0 0.0
        %1033 = vmatpush2.xpose.msra.mxu0 %v759
        %1034 = vmatprep.subr.mxu0 0.0
        %1035 = vmatpush2.xpose.msra.mxu0 %v758
        %1036 = vmatprep.subr.mxu0 0.0
        %1037 = vmatpush2.xpose.msra.mxu0 %v757
        %1038 = vmatprep.subr.mxu0 0.0
        %1039 = vmatpush2.xpose.msra.mxu0 %v756
        %1040 = vmatprep.subr.mxu0 0.0
        %1041 = vmatpush2.xpose.msra.mxu0 %v755
        %1042 = vmatprep.subr.mxu0 0.0
        %1043 = vmatpush2.xpose.msra.mxu0 %v754
        %1044 = vmatprep.subr.mxu0 0.0
        %1045 = vmatpush2.xpose.msra.mxu0 %v753
        %1046 = vmatprep.mubr.f32.mxu0 0.0
        %1047 = vmatmul.mubr.f32.gmra.mxu0 %v640
        %v1048 = vpop.f32.mrf.mxu0
        %v1049 = vadd.f32 0.0, %v1048
        %v1050 = vpop.f32.mrf.mxu0
        %v1051 = vadd.f32 0.0, %v1050
        %1052 = vdwg.mxu0
        %v1053 = vsub.f32 0.0, %v836
        %v1054 = vsub.f32 0.0, %v838
        %v1055 = vsub.f32 0.0, %v907
        %v1056 = vsub.f32 0.0, %v909
        %v1057 = vsub.f32 0.0, %v978
        %v1058 = vsub.f32 0.0, %v980
        %v1059 = vsub.f32 0.0, %v1049
        %v1060 = vsub.f32 0.0, %v1051
        %v1061 = vmax.f32 %v1053, 0.0
        %v1062 = vmax.f32 %v1054, 0.0
        %v1063 = vmax.f32 %v1055, 0.0
        %v1064 = vmax.f32 %v1056, 0.0
        %v1065 = vmax.f32 %v1057, 0.0
        %v1066 = vmax.f32 %v1058, 0.0
        %v1067 = vmax.f32 %v1059, 0.0
        %v1068 = vmax.f32 %v1060, 0.0
        %v1069 = vand.u32 2147483647, %v836
        %v1070 = vand.u32 2147483647, %v838
        %v1071 = vand.u32 2147483647, %v907
        %v1072 = vand.u32 2147483647, %v909
        %v1073 = vand.u32 2147483647, %v978
        %v1074 = vand.u32 2147483647, %v980
        %v1075 = vand.u32 2147483647, %v1049
        %v1076 = vand.u32 2147483647, %v1051
        %v1077 = vsub.f32 0.0, %v1069
        %v1078 = vsub.f32 0.0, %v1070
        %v1079 = vsub.f32 0.0, %v1071
        %v1080 = vsub.f32 0.0, %v1072
        %v1081 = vsub.f32 0.0, %v1073
        %v1082 = vsub.f32 0.0, %v1074
        %v1083 = vsub.f32 0.0, %v1075
        %v1084 = vsub.f32 0.0, %v1076
        %v1085 = vmul.f32 %v1077, 1.442695
        %v1086 = vpow.pop %v1085
        %v1087 = vmul.f32 %v1078, 1.442695
        %v1088 = vpow.pop %v1087
        %v1089 = vmul.f32 %v1079, 1.442695
        %v1090 = vpow.pop %v1089
        %v1091 = vmul.f32 %v1080, 1.442695
        %v1092 = vpow.pop %v1091
        %v1093 = vmul.f32 %v1081, 1.442695
        %v1094 = vpow.pop %v1093
        %v1095 = vmul.f32 %v1082, 1.442695
        %v1096 = vpow.pop %v1095
        %v1097 = vmul.f32 %v1083, 1.442695
        %v1098 = vpow.pop %v1097
        %v1099 = vmul.f32 %v1084, 1.442695
        %v1100 = vpow.pop %v1099
        %v1101 = vadd.f32 %v1086, 1.0
        %v1102 = vadd.f32 %v1088, 1.0
        %v1103 = vadd.f32 %v1090, 1.0
        %v1104 = vadd.f32 %v1092, 1.0
        %v1105 = vadd.f32 %v1094, 1.0
        %v1106 = vadd.f32 %v1096, 1.0
        %v1107 = vadd.f32 %v1098, 1.0
        %v1108 = vadd.f32 %v1100, 1.0
        %v1109 = vlog2.pop %v1101
        %v1110 = vmul.f32 %v1109, 0.6931472
        %v1111 = vlog2.pop %v1102
        %v1112 = vmul.f32 %v1111, 0.6931472
        %v1113 = vlog2.pop %v1103
        %v1114 = vmul.f32 %v1113, 0.6931472
        %v1115 = vlog2.pop %v1104
        %v1116 = vmul.f32 %v1115, 0.6931472
        %v1117 = vlog2.pop %v1105
        %v1118 = vmul.f32 %v1117, 0.6931472
        %v1119 = vlog2.pop %v1106
        %v1120 = vmul.f32 %v1119, 0.6931472
        %v1121 = vlog2.pop %v1107
        %v1122 = vmul.f32 %v1121, 0.6931472
        %v1123 = vlog2.pop %v1108
        %v1124 = vmul.f32 %v1123, 0.6931472
        %v1125 = vadd.f32 %v1061, %v1110
        %v1126 = vadd.f32 %v1062, %v1112
        %v1127 = vadd.f32 %v1063, %v1114
        %v1128 = vadd.f32 %v1064, %v1116
        %v1129 = vadd.f32 %v1065, %v1118
        %v1130 = vadd.f32 %v1066, %v1120
        %v1131 = vadd.f32 %v1067, %v1122
        %v1132 = vadd.f32 %v1068, %v1124
        %v1133 = vsub.f32 0.0, %v1125
        %v1134 = vsub.f32 0.0, %v1126
        %v1135 = vsub.f32 0.0, %v1127
        %v1136 = vsub.f32 0.0, %v1128
        %v1137 = vsub.f32 0.0, %v1129
        %v1138 = vsub.f32 0.0, %v1130
        %v1139 = vsub.f32 0.0, %v1131
        %v1140 = vsub.f32 0.0, %v1132
        %v1141 = vmax.f32 %v632, 1e-12
        %v1142 = vmax.f32 %v633, 1e-12
        %v1143 = vmax.f32 %v634, 1e-12
        %v1144 = vmax.f32 %v635, 1e-12
        %v1145 = vmax.f32 %v636, 1e-12
        %v1146 = vmax.f32 %v637, 1e-12
        %v1147 = vmax.f32 %v638, 1e-12
        %v1148 = vmax.f32 %v639, 1e-12
        %v1149 = vlog2.pop %v1141
        %v1150 = vmul.f32 %v1149, 0.6931472
        %v1151 = vlog2.pop %v1142
        %v1152 = vmul.f32 %v1151, 0.6931472
        %v1153 = vlog2.pop %v1143
        %v1154 = vmul.f32 %v1153, 0.6931472
        %v1155 = vlog2.pop %v1144
        %v1156 = vmul.f32 %v1155, 0.6931472
        %v1157 = vlog2.pop %v1145
        %v1158 = vmul.f32 %v1157, 0.6931472
        %v1159 = vlog2.pop %v1146
        %v1160 = vmul.f32 %v1159, 0.6931472
        %v1161 = vlog2.pop %v1147
        %v1162 = vmul.f32 %v1161, 0.6931472
        %v1163 = vlog2.pop %v1148
        %v1164 = vmul.f32 %v1163, 0.6931472
        %v1165 = vmul.f32 %v1133, 0.2
        %v1166 = vmul.f32 %v1134, 0.2
        %v1167 = vmul.f32 %v1135, 0.2
        %v1168 = vmul.f32 %v1136, 0.2
        %v1169 = vmul.f32 %v1137, 0.2
        %v1170 = vmul.f32 %v1138, 0.2
        %v1171 = vmul.f32 %v1139, 0.2
        %v1172 = vmul.f32 %v1140, 0.2
        %v1173 = vmul.f32 %v1150, 0.8
        %v1174 = vmul.f32 %v1152, 0.8
        %v1175 = vmul.f32 %v1154, 0.8
        %v1176 = vmul.f32 %v1156, 0.8
        %v1177 = vmul.f32 %v1158, 0.8
        %v1178 = vmul.f32 %v1160, 0.8
        %v1179 = vmul.f32 %v1162, 0.8
        %v1180 = vmul.f32 %v1164, 0.8
        %v1181 = vadd.f32 %v1165, %v1173
        %v1182 = vadd.f32 %v1166, %v1174
        %v1183 = vadd.f32 %v1167, %v1175
        %v1184 = vadd.f32 %v1168, %v1176
        %v1185 = vadd.f32 %v1169, %v1177
        %v1186 = vadd.f32 %v1170, %v1178
        %v1187 = vadd.f32 %v1171, %v1179
        %v1188 = vadd.f32 %v1172, %v1180
        %1189 = vst [vmem:[%s265] sm:$0xff] %v1181
        %1190 = vst [vmem:[%s265 + $0x8] sm:$0xff] %v1182
        %1191 = vst [vmem:[%s265 + $0x10] sm:$0xff] %v1183
        %1192 = vst [vmem:[%s265 + $0x18] sm:$0xff] %v1184
        %1193 = vst [vmem:[%s265 + $0x20] sm:$0xff] %v1185
        %1194 = vst [vmem:[%s265 + $0x28] sm:$0xff] %v1186
        %1195 = vst [vmem:[%s265 + $0x30] sm:$0xff] %v1187
        %1196 = vst [vmem:[%s265 + $0x38] sm:$0xff] %v1188
        %s1197 = sand.u32 %s126, 1
        %s1198 = scalar_lea.sflag [#allocation4], %s1197
        %s1199 = sand.u32 %s126, 1
        %s1200 = smul.addr %s1199, 64
        %s1201 = scalar_lea.vmem [#allocation7], %s1200
        // Predicated region
        $region45: #{tpu_custom_call.1} parent=35 // pred_check
          %p1202 = pneg %p136
        $region46: #{tpu_custom_call.1} parent=35 // pred_check_branch
          %1204 = sbr.rel (%p1202) target = $region48
        $region47: #{tpu_custom_call.1} parent=35 // pred_region
          %s1205 = smul.u32 8, %s24
          %s1206 = ssub.s32 15, %s1205
          %p1207 = scmp.lt.s32.totalorder %s1206, 8
          %s1208 = scalar_select %p1207, %s1206, 8
          %s1209 = smul.u32 128, %s1208
          %s1211 = ssub.s32 1024, %s1209
          %1212 = vsyncadd %s1198, %s1211
          %p1213 = scmp.ne.s32.totalorder 0, %s1209
          %s1214 = smul.addr %s1205, 128
          %s1215 = scalar_lea.hbm %s4, %s1214
          %s1216 = smul.u32 %s1208, 8
          %s1217 = sshll.u32 %s1216, 4
          %s1218 = sshll.u32 %s1201, 4
          %s1219 = int_to_ptr.vmem [resolvable:$true] %s1218
          %1221 = dma.vmem_to_hbm [thread:$0]  (%p1213), %s1219, %s1217, %s1215, %s1198
        $region48: #{tpu_custom_call.1} parent=35 // pred_fallthru
          _
      $region36: #{tpu_custom_call.1} parent=5 // pred_fallthru
        _
      %p1222 = scmp.le.s32.totalorder 2, %s19
      // Predicated region
      $region49: #{tpu_custom_call.1} parent=5 // pred_check
        %p1223 = pneg %p1222
      $region50: #{tpu_custom_call.1} parent=5 // pred_check_branch
        %1225 = sbr.rel (%p1223) target = $region52
      $region51: #{tpu_custom_call.1} parent=5 // pred_region
        %s1226 = ssub.s32 %s19, 2
        // Predicated region
        $region53: #{tpu_custom_call.1} parent=51 // pred_check
          %p1227 = pneg %p142
        $region54: #{tpu_custom_call.1} parent=51 // pred_check_branch
          %1229 = sbr.rel (%p1227) target = $region56
        $region55: #{tpu_custom_call.1} parent=51 // pred_region
          %s1230 = sand.u32 %s127, 1
          %s1231 = scalar_lea.sflag [#allocation4], %s1230
          %s1232 = sand.u32 %s127, 1
          %s1233 = smul.addr %s1232, 64
          %s1234 = scalar_lea.vmem [#allocation7], %s1233
          %1235 = dma.done %s1231, 1024
        $region56: #{tpu_custom_call.1} parent=51 // pred_fallthru
          _
      $region52: #{tpu_custom_call.1} parent=5 // pred_fallthru
        _
    $region6: #{tpu_custom_call.1} parent=1 // loop_footer
      %s23 = sadd.s32 1, %s19
    $region7: #{tpu_custom_call.1} parent=1 // loop_footer_branch
      %18 = sbr.rel target = $region3
    $region8: #{tpu_custom_call.1} parent=1 // loop_exit
      _
    %1236 = vsyncpa [#allocation3], 1
    %s1237 = scalar_lea.sflag [#allocation3], 1
    %1238 = vsyncpa %s1237, 1
    %1239 = vsyncpa [#allocation6], 1
    %s1240 = scalar_lea.sflag [#allocation6], 1
    %1241 = vsyncpa %s1240, 1
    %1242 = vsyncpa [#allocation4], 1
    %s1243 = scalar_lea.sflag [#allocation4], 1
    %1244 = vsyncpa %s1243, 1

</llo_original>
